<compile_context>
chip_gen: v6e
topology: v6e:2x2x1
jax: 0.10.0
libtpu: 0.0.40
codegen_flags: <defaults>
</compile_context>

<pallas_src>
import math
import functools

import jax
import jax.numpy as jnp
from jax import lax
from jax.experimental import pallas as pl
from jax.experimental.pallas import tpu as pltpu


def _choose_head_groups(n_heads, d_head):
    """Pick heads-per-group so each group's output width is a multiple of 128 lanes
    when possible; otherwise keep all heads in a single group."""
    if d_head % 128 == 0:
        heads_per_group = 1
    else:
        heads_per_group = n_heads
        for cand in range(1, n_heads + 1):
            if n_heads % cand == 0 and (cand * d_head) % 128 == 0:
                heads_per_group = cand
                break
    return n_heads // heads_per_group, heads_per_group


def _prepare_params(wq, bq, wk, bk, wv, bv, n_groups, group_width, compute_dtype):
    """Pre-transpose torch-layout (out,in) weights to (in,out) and fuse Q/K/V columns
    per head group: W_grp[g] = [WqT[:, cols_g] | WkT[:, cols_g] | WvT[:, cols_g]]."""
    wqT, wkT, wvT = wq.T, wk.T, wv.T  # (D_in, D_out)
    w_groups, b_groups = [], []
    for g in range(n_groups):
        cols = slice(g * group_width, (g + 1) * group_width)
        w_groups.append(jnp.concatenate(
            [wqT[:, cols], wkT[:, cols], wvT[:, cols]], axis=1))
        b_groups.append(jnp.concatenate([bq[cols], bk[cols], bv[cols]], axis=0))
    w_grp = jnp.stack(w_groups, axis=0).astype(compute_dtype)          # (G, D, 3*Wg)
    b_grp = (jnp.stack(b_groups, axis=0)
             .reshape(n_groups, 1, 3 * group_width)
             .astype(jnp.float32))                                     # (G, 1, 3*Wg)
    return w_grp, b_grp


def _msa_kernel(x_ref, w_ref, b_ref, o_ref, *,
                heads_per_group, d_head, scale, compute_dtype, use_approx_recip):
    x = x_ref[0]          # (S, D)        compute_dtype
    w = w_ref[0]          # (D, 3*Wg)     compute_dtype (pre-transposed, fused)
    b = b_ref[0]          # (1, 3*Wg)     f32

    # Fused Q/K/V projection for this head group: one MXU matmul, f32 accumulation.
    qkv = jnp.dot(x, w, preferred_element_type=jnp.float32) + b        # (S, 3*Wg) f32

    wg = heads_per_group * d_head
    q = qkv[:, 0 * wg:1 * wg] * scale   # fold 1/sqrt(d_head) into Q once
    k = qkv[:, 1 * wg:2 * wg]
    v = qkv[:, 2 * wg:3 * wg]

    head_outs = []
    for h in range(heads_per_group):    # static loop; heads_per_group is small
        lo, hi = h * d_head, (h + 1) * d_head
        qh = q[:, lo:hi].astype(compute_dtype)
        kh = k[:, lo:hi].astype(compute_dtype)
        vh = v[:, lo:hi].astype(compute_dtype)

        # Q_h @ K_h^T without an explicit transpose: contract last dims on the MXU.
        scores = lax.dot_general(
            qh, kh, dimension_numbers=(((1,), (1,)), ((), ())),
            preferred_element_type=jnp.float32)                        # (S, S) f32

        # Numerically-stable softmax, kept in f32.
        m = jnp.max(scores, axis=-1, keepdims=True)
        p = jnp.exp(scores - m)
        l = jnp.sum(p, axis=-1, keepdims=True)
        if use_approx_recip:
            attn = p * pl.reciprocal(l, approx=True)    # EUP slot, ~free
        else:
            attn = p / l                                 # exact (f32 path)

        head_outs.append(
            jnp.dot(attn.astype(compute_dtype), vh,
                    preferred_element_type=jnp.float32))               # (S, d_head) f32

    out = head_outs[0] if heads_per_group == 1 else jnp.concatenate(head_outs, axis=-1)
    # Single lane-dense store of the whole head-group slab (no masked per-head stores).
    o_ref[0] = out.astype(o_ref.dtype)


def msa_forward(x, wq, bq, wk, bk, wv, bv, *, n_heads, compute_dtype=jnp.float32):
    """x: (N, S, D).  Weights: (D, D) torch nn.Linear layout (out, in), biases (D,)."""
    N, S, D = x.shape
    assert D % n_heads == 0
    d_head = D // n_heads
    scale = 1.0 / math.sqrt(d_head)

    n_groups, heads_per_group = _choose_head_groups(n_heads, d_head)
    group_width = heads_per_group * d_head

    w_grp, b_grp = _prepare_params(wq, bq, wk, bk, wv, bv,
                                   n_groups, group_width, compute_dtype)
    x_cd = x.astype(compute_dtype)
    use_approx_recip = jnp.dtype(compute_dtype) != jnp.dtype(jnp.float32)

    kernel = functools.partial(
        _msa_kernel,
        heads_per_group=heads_per_group,
        d_head=d_head,
        scale=scale,
        compute_dtype=compute_dtype,
        use_approx_recip=use_approx_recip,
    )

    # Explicit VMEM budget: double-buffered blocks + f32 temporaries, generous headroom,
    # capped below v7x's 64 MiB physical VMEM.
    itemsize = jnp.dtype(compute_dtype).itemsize
    block_bytes = (S * D * itemsize                      # x block
                   + D * 3 * group_width * itemsize      # fused weight block
                   + 3 * group_width * 4                 # bias block (f32)
                   + S * group_width * 4)                # output block
    tmp_bytes = 4 * (3 * S * group_width                 # qkv (f32)
                     + 2 * S * S                         # scores + p
                     + 2 * S * group_width)              # head outs / concat
    vmem_limit = int(min(64 * (1 << 20),
                         max(4 * (2 * block_bytes + tmp_bytes), 8 * (1 << 20))))

    grid_spec = pltpu.PrefetchScalarGridSpec(
        num_scalar_prefetch=0,
        grid=(N, n_groups),
        in_specs=[
            pl.BlockSpec((1, S, D), lambda i, g: (i, 0, 0)),                  # x
            pl.BlockSpec((1, D, 3 * group_width), lambda i, g: (g, 0, 0)),    # W_qkv group
            pl.BlockSpec((1, 1, 3 * group_width), lambda i, g: (g, 0, 0)),    # b_qkv group
        ],
        out_specs=pl.BlockSpec((1, S, group_width), lambda i, g: (i, 0, g)),
    )

    return pl.pallas_call(
        kernel,
        out_shape=jax.ShapeDtypeStruct((N, S, D), x.dtype),
        grid_spec=grid_spec,
        compiler_params=pltpu.CompilerParams(
            dimension_semantics=("parallel", "parallel"),
            vmem_limit_bytes=vmem_limit),
    )(x_cd, w_grp, b_grp)


def msa_reference(x, wq, bq, wk, bk, wv, bv, *, n_heads):
    """Pure-JAX reference mirroring the PyTorch forward."""
    N, S, D = x.shape
    d_head = D // n_heads
    q = x @ wq.T + bq
    k = x @ wk.T + bk
    v = x @ wv.T + bv
    q = q.reshape(N, S, n_heads, d_head).transpose(0, 2, 1, 3)
    k = k.reshape(N, S, n_heads, d_head).transpose(0, 2, 1, 3)
    v = v.reshape(N, S, n_heads, d_head).transpose(0, 2, 1, 3)
    scores = jnp.einsum("nhqd,nhkd->nhqk", q, k) / math.sqrt(d_head)
    attn = jax.nn.softmax(scores, axis=-1)
    out = jnp.einsum("nhqk,nhkd->nhqd", attn, v)
    return out.transpose(0, 2, 1, 3).reshape(N, S, D)


if __name__ == "__main__":
    # Small shapes consistent with the module: batch N=2, seq_len=8, d=32, 2 heads.
    N, S, D = 2, 8, 32
    n_heads = 2

    key = jax.random.PRNGKey(0)
    kx, kwq, kbq, kwk, kbk, kwv, kbv = jax.random.split(key, 7)

    x = jax.random.normal(kx, (N, S, D), dtype=jnp.float32)

    # Deterministic parameter init (torch.nn.Linear-like uniform bound 1/sqrt(d)).
    bound = 1.0 / math.sqrt(D)
    wq = jax.random.uniform(kwq, (D, D), jnp.float32, -bound, bound)
    bq = jax.random.uniform(kbq, (D,), jnp.float32, -bound, bound)
    wk = jax.random.uniform(kwk, (D, D), jnp.float32, -bound, bound)
    bk = jax.random.uniform(kbk, (D,), jnp.float32, -bound, bound)
    wv = jax.random.uniform(kwv, (D, D), jnp.float32, -bound, bound)
    bv = jax.random.uniform(kbv, (D,), jnp.float32, -bound, bound)

    ref = msa_reference(x, wq, bq, wk, bk, wv, bv, n_heads=n_heads)

    # f32 compute path: exact match with the module's math.
    out_f32 = msa_forward(x, wq, bq, wk, bk, wv, bv,
                          n_heads=n_heads, compute_dtype=jnp.float32)
    out_f32 = jax.block_until_ready(out_f32)
    assert out_f32.shape == (N, S, D)
    assert jnp.allclose(out_f32, ref, atol=1e-5, rtol=1e-5), "f32 mismatch vs reference"

    # bf16 MXU path (f32 accumulation + f32 softmax): looser tolerance.
    out_bf16 = msa_forward(x, wq, bq, wk, bk, wv, bv,
                           n_heads=n_heads, compute_dtype=jnp.bfloat16)
    out_bf16 = jax.block_until_ready(out_bf16)
    assert out_bf16.shape == (N, S, D)
    assert jnp.allclose(out_bf16, ref, atol=5e-2, rtol=5e-2), "bf16 mismatch vs reference"

    print("KERNEL_OK")
</pallas_src>

<mosaic_0001>
module attributes {stable_mosaic.version = 11 : i64} {
  func.func @_msa_kernel(%arg0: i32, %arg1: i32, %arg2: memref<1x8x32xf32, #tpu.memory_space<vmem>>, %arg3: memref<1x32x96xf32, #tpu.memory_space<vmem>>, %arg4: memref<1x1x96xf32, #tpu.memory_space<vmem>>, %arg5: memref<1x8x32xf32, #tpu.memory_space<vmem>>) attributes {dimension_semantics = [#tpu.dimension_semantics<parallel>, #tpu.dimension_semantics<parallel>], iteration_bounds = array<i64: 2, 1>, scalar_prefetch = 0 : i64, scratch_operands = 0 : i64, tpu.core_type = #tpu.core_type<tc>, window_params = [{transform_indices = @transform_0, window_bounds = array<i64: 1, 8, 32>}, {transform_indices = @transform_1, window_bounds = array<i64: 1, 32, 96>}, {transform_indices = @transform_2, window_bounds = array<i64: 1, 1, 96>}, {transform_indices = @transform_3, window_bounds = array<i64: 1, 8, 32>}]} {
    %c0 = arith.constant 0 : index
    %c0_0 = arith.constant 0 : index
    %c0_1 = arith.constant 0 : index
    %0 = vector.load %arg2[%c0, %c0_0, %c0_1] : memref<1x8x32xf32, #tpu.memory_space<vmem>>, vector<1x8x32xf32>
    %1 = vector.shape_cast %0 : vector<1x8x32xf32> to vector<8x32xf32>
    %c0_2 = arith.constant 0 : index
    %c0_3 = arith.constant 0 : index
    %c0_4 = arith.constant 0 : index
    %2 = vector.load %arg3[%c0_2, %c0_3, %c0_4] : memref<1x32x96xf32, #tpu.memory_space<vmem>>, vector<1x32x96xf32>
    %3 = vector.shape_cast %2 : vector<1x32x96xf32> to vector<32x96xf32>
    %c0_5 = arith.constant 0 : index
    %c0_6 = arith.constant 0 : index
    %c0_7 = arith.constant 0 : index
    %4 = vector.load %arg4[%c0_5, %c0_6, %c0_7] : memref<1x1x96xf32, #tpu.memory_space<vmem>>, vector<1x1x96xf32>
    %5 = vector.shape_cast %4 : vector<1x1x96xf32> to vector<1x96xf32>
    %cst = arith.constant dense<0.000000e+00> : vector<8x96xf32>
    %6 = tpu.matmul %1, %3, %cst {dimension_numbers = #tpu.dot_dimension_numbers<[1], [0], [0], [1], [0, 0, 1, 1], [], []>} : vector<8x32xf32>, vector<32x96xf32>, vector<8x96xf32> -> vector<8x96xf32>
    %7 = vector.broadcast %5 : vector<1x96xf32> to vector<8x96xf32>
    %8 = arith.addf %6, %7 : vector<8x96xf32>
    %9 = vector.extract_strided_slice %8 {offsets = [0, 0], sizes = [8, 32], strides = [1, 1]} : vector<8x96xf32> to vector<8x32xf32>
    %cst_8 = arith.constant 2.500000e-01 : f32
    %10 = vector.broadcast %cst_8 : f32 to vector<8x32xf32>
    %11 = arith.mulf %9, %10 : vector<8x32xf32>
    %12 = vector.extract_strided_slice %8 {offsets = [0, 32], sizes = [8, 32], strides = [1, 1]} : vector<8x96xf32> to vector<8x32xf32>
    %13 = vector.extract_strided_slice %8 {offsets = [0, 64], sizes = [8, 32], strides = [1, 1]} : vector<8x96xf32> to vector<8x32xf32>
    %14 = vector.extract_strided_slice %11 {offsets = [0, 0], sizes = [8, 16], strides = [1, 1]} : vector<8x32xf32> to vector<8x16xf32>
    %15 = vector.extract_strided_slice %12 {offsets = [0, 0], sizes = [8, 16], strides = [1, 1]} : vector<8x32xf32> to vector<8x16xf32>
    %16 = vector.extract_strided_slice %13 {offsets = [0, 0], sizes = [8, 16], strides = [1, 1]} : vector<8x32xf32> to vector<8x16xf32>
    %cst_9 = arith.constant dense<0.000000e+00> : vector<8x8xf32>
    %17 = tpu.matmul %14, %15, %cst_9 {dimension_numbers = #tpu.dot_dimension_numbers<[1], [1], [0], [0], [0, 0, 1, 0], [], []>} : vector<8x16xf32>, vector<8x16xf32>, vector<8x8xf32> -> vector<8x8xf32>
    %cst_10 = arith.constant dense<0xFF800000> : vector<8xf32>
    %18 = vector.multi_reduction <maximumf>, %17, %cst_10 [1] : vector<8x8xf32> to vector<8xf32>
    %19 = vector.shape_cast %18 : vector<8xf32> to vector<8x1xf32>
    %20 = vector.broadcast %19 : vector<8x1xf32> to vector<8x8xf32>
    %21 = arith.subf %17, %20 : vector<8x8xf32>
    %22 = math.exp %21 : vector<8x8xf32>
    %cst_11 = arith.constant dense<0.000000e+00> : vector<8xf32>
    %23 = vector.multi_reduction <add>, %22, %cst_11 [1] : vector<8x8xf32> to vector<8xf32>
    %24 = vector.shape_cast %23 : vector<8xf32> to vector<8x1xf32>
    %25 = vector.broadcast %24 : vector<8x1xf32> to vector<8x8xf32>
    %26 = arith.divf %22, %25 : vector<8x8xf32>
    %cst_12 = arith.constant dense<0.000000e+00> : vector<8x16xf32>
    %27 = tpu.matmul %26, %16, %cst_12 {dimension_numbers = #tpu.dot_dimension_numbers<[1], [0], [0], [1], [0, 0, 1, 1], [], []>} : vector<8x8xf32>, vector<8x16xf32>, vector<8x16xf32> -> vector<8x16xf32>
    %28 = vector.extract_strided_slice %11 {offsets = [0, 16], sizes = [8, 16], strides = [1, 1]} : vector<8x32xf32> to vector<8x16xf32>
    %29 = vector.extract_strided_slice %12 {offsets = [0, 16], sizes = [8, 16], strides = [1, 1]} : vector<8x32xf32> to vector<8x16xf32>
    %30 = vector.extract_strided_slice %13 {offsets = [0, 16], sizes = [8, 16], strides = [1, 1]} : vector<8x32xf32> to vector<8x16xf32>
    %cst_13 = arith.constant dense<0.000000e+00> : vector<8x8xf32>
    %31 = tpu.matmul %28, %29, %cst_13 {dimension_numbers = #tpu.dot_dimension_numbers<[1], [1], [0], [0], [0, 0, 1, 0], [], []>} : vector<8x16xf32>, vector<8x16xf32>, vector<8x8xf32> -> vector<8x8xf32>
    %cst_14 = arith.constant dense<0xFF800000> : vector<8xf32>
    %32 = vector.multi_reduction <maximumf>, %31, %cst_14 [1] : vector<8x8xf32> to vector<8xf32>
    %33 = vector.shape_cast %32 : vector<8xf32> to vector<8x1xf32>
    %34 = vector.broadcast %33 : vector<8x1xf32> to vector<8x8xf32>
    %35 = arith.subf %31, %34 : vector<8x8xf32>
    %36 = math.exp %35 : vector<8x8xf32>
    %cst_15 = arith.constant dense<0.000000e+00> : vector<8xf32>
    %37 = vector.multi_reduction <add>, %36, %cst_15 [1] : vector<8x8xf32> to vector<8xf32>
    %38 = vector.shape_cast %37 : vector<8xf32> to vector<8x1xf32>
    %39 = vector.broadcast %38 : vector<8x1xf32> to vector<8x8xf32>
    %40 = arith.divf %36, %39 : vector<8x8xf32>
    %cst_16 = arith.constant dense<0.000000e+00> : vector<8x16xf32>
    %41 = tpu.matmul %40, %30, %cst_16 {dimension_numbers = #tpu.dot_dimension_numbers<[1], [0], [0], [1], [0, 0, 1, 1], [], []>} : vector<8x8xf32>, vector<8x16xf32>, vector<8x16xf32> -> vector<8x16xf32>
    %42 = tpu.concatenate %27, %41 in 1 : vector<8x16xf32>, vector<8x16xf32> -> vector<8x32xf32>
    %c0_17 = arith.constant 0 : index
    %c0_18 = arith.constant 0 : index
    %c0_19 = arith.constant 0 : index
    %43 = vector.load %arg5[%c0_17, %c0_18, %c0_19] : memref<1x8x32xf32, #tpu.memory_space<vmem>>, vector<1x8x32xf32>
    %44 = vector.shape_cast %43 : vector<1x8x32xf32> to vector<8x32xf32>
    %45 = vector.shape_cast %42 : vector<8x32xf32> to vector<1x8x32xf32>
    tpu.vector_store %arg5[%c0_17, %c0_18, %c0_19], %45 {strides = array<i32>} : memref<1x8x32xf32, #tpu.memory_space<vmem>>, vector<1x8x32xf32>,
    return
  }
  func.func @transform_0(%arg0: i32, %arg1: i32) -> (i32, i32, i32) {
    %c0_i32 = arith.constant 0 : i32
    %c0_i32_0 = arith.constant 0 : i32
    %c0_i32_1 = arith.constant 0 : i32
    return %arg0, %c0_i32, %c0_i32_0 : i32, i32, i32
  }
  func.func @transform_1(%arg0: i32, %arg1: i32) -> (i32, i32, i32) {
    %c0_i32 = arith.constant 0 : i32
    %c0_i32_0 = arith.constant 0 : i32
    %c0_i32_1 = arith.constant 0 : i32
    return %arg1, %c0_i32, %c0_i32_0 : i32, i32, i32
  }
  func.func @transform_2(%arg0: i32, %arg1: i32) -> (i32, i32, i32) {
    %c0_i32 = arith.constant 0 : i32
    %c0_i32_0 = arith.constant 0 : i32
    %c0_i32_1 = arith.constant 0 : i32
    return %arg1, %c0_i32, %c0_i32_0 : i32, i32, i32
  }
  func.func @transform_3(%arg0: i32, %arg1: i32) -> (i32, i32, i32) {
    %c0_i32 = arith.constant 0 : i32
    %c0_i32_0 = arith.constant 0 : i32
    return %arg0, %c0_i32, %arg1 : i32, i32, i32
  }
}

</mosaic_0001>

<llo_original>
// kernel: tpu_custom_call.1
$region0: #{tpu_custom_call.1}
  #allocation0 [shape = 'u32[]', space=smem, size = 0x4, offset = 0x4, fixed_abs, tag = 'smem constant byte address 0x4 - core index']
  #allocation1 [shape = 'u32[144,128]{1,0:T(1,128)}', space=vmem, size = 0x12000, scoped, tag = 'internal scratch']
  %s0 = inlined_call_operand.hbm [shape: f32[2,8,32], index: 0, kind: input, shape index: {}]
  %s1 = inlined_call_operand.hbm [shape: f32[1,32,96], index: 1, kind: input, shape index: {}]
  %s2 = inlined_call_operand.vmem [shape: f32[1,1,96], index: 2, kind: input, shape index: {}]
  %s3 = inlined_call_operand.hbm [shape: f32[2,8,32], index: 3, kind: output, shape index: {}]
  %s4 = sld [smem:[#allocation0]]
  $region53: #{tpu_custom_call.1} parent=0
    _
  %s6 = ssub.s32 1, %s4
  %s7 = scalar_select 0, %s6, %s4
  $region1: #{tpu_custom_call.1} parent=0
    #allocation2 [shape = 'u8[8192]{0}', space=vmem, size = 0x2000, scoped, tag = 'input window, operand 0']
    #allocation3 [shape = 's32[2]{0}', space=sflag, size = 0x8, scoped, tag = 'scoped memory for tpu_custom_call.1']
    #allocation4 [shape = 's32[2]{0}', space=sflag, size = 0x8, scoped, tag = 'scoped memory for tpu_custom_call.1']
    #allocation5 [shape = 'u8[16384]{0}', space=vmem, size = 0x4000, scoped, tag = 'input window, operand 1, single buffered']
    #allocation6 [shape = 's32[1]{0}', space=sflag, size = 0x4, scoped, tag = 'scoped memory for tpu_custom_call.1']
    #allocation7 [shape = 'u8[8192]{0}', space=vmem, size = 0x2000, scoped, tag = 'output window, operand 0']
    %8 = vsyncpa [#allocation3], 0
    %s9 = scalar_lea.sflag [#allocation3], 1
    %10 = vsyncpa %s9, 0
    %11 = vsyncpa [#allocation6], 0
    %12 = vsyncpa [#allocation4], 0
    %s13 = scalar_lea.sflag [#allocation4], 1
    %14 = vsyncpa %s13, 0
    loop: start=0, step=1, limit=4
    $region2: #{tpu_custom_call.1} parent=1 // loop_pre_header
      _
    $region3: #{tpu_custom_call.1} parent=1 // loop_header
      %s16 = sphi 0, %s20
      %p17 = scmp.ge.s32.totalorder %s16, 4
      %s23 = sphi 0, %s35
      %s24 = sphi 0, %s31
      %s25 = sphi 0, %s23
      %s26 = sphi 0, %s24
      %s27 = sphi 0, %s25
      %s28 = sphi 0, %s26
      %s38 = sphi 0, %s40
      %s41 = sphi 0, %s38
      %s42 = sphi 0, %s41
      %s58 = sphi 0, %s42
      %s64 = sphi 0, %s66
      %s67 = sphi 0, %s64
      %s68 = sphi 0, %s67
      %s84 = sphi 0, %s68
      %s90 = sphi 0, %s92
      %s93 = sphi 0, %s90
      %s94 = sphi 0, %s93
      %s110 = sphi 0, %s94
      %s118 = sphi 0, %s120
      %s121 = sphi 0, %s118
      %s122 = sphi 0, %s121
      %s138 = sphi 0, %s122
    $region4: #{tpu_custom_call.1} parent=1 // loop_header_branch
      %19 = sbr.rel (%p17) target = $region8
    $region5: #{tpu_custom_call.1} parent=1 // loop_body
      %s21 = ssub.s32 %s16, 1
      %s22 = ssub.s32 %s16, 2
      %s29 = sadd.s32 1, %s24
      %p30 = scmp.ge.s32.totalorder %s29, 1
      %s31 = scalar_select %p30, 0, %s29
      %s32 = sadd.s32 1, %s23
      %s33 = scalar_select %p30, %s32, %s23
      %p34 = scmp.ge.s32.totalorder %s33, 2
      %s35 = scalar_select %p34, 0, %s33
      %s36 = ssub.s32 %s23, %s35
      %p37 = scmp.eq.s32.totalorder %s36, 0
      %s39 = sadd.s32 %s38, 1
      %s40 = scalar_select %p37, %s38, %s39
      %p43 = pneg %p37
      %p44 = scmp.eq.s32.totalorder %s16, 1
      %p45 = por %p43, %p44
      %p46 = scmp.ne.s32.totalorder %s38, %s41
      %p47 = scmp.eq.s32.totalorder %s16, 0
      %p48 = por %p46, %p47
      %p49 = scmp.ne.s32.totalorder %s38, %s41
      %p50 = scmp.eq.s32.totalorder %s21, 1
      %p51 = por %p49, %p50
      %p52 = scmp.ne.s32.totalorder %s41, %s42
      %p53 = scmp.eq.s32.totalorder %s21, 0
      %p54 = por %p52, %p53
      %p55 = scmp.ne.s32.totalorder %s41, %s42
      %p56 = scmp.eq.s32.totalorder %s22, 1
      %p57 = por %p55, %p56
      %p59 = scmp.ne.s32.totalorder %s42, %s58
      %p60 = scmp.eq.s32.totalorder %s22, 0
      %p61 = por %p59, %p60
      %s62 = ssub.s32 %s24, %s31
      %p63 = scmp.eq.s32.totalorder %s62, 0
      %s65 = sadd.s32 %s64, 1
      %s66 = scalar_select %p63, %s64, %s65
      %p69 = pneg %p63
      %p70 = scmp.eq.s32.totalorder %s16, 1
      %p71 = por %p69, %p70
      %p72 = scmp.ne.s32.totalorder %s64, %s67
      %p73 = scmp.eq.s32.totalorder %s16, 0
      %p74 = por %p72, %p73
      %p75 = scmp.ne.s32.totalorder %s64, %s67
      %p76 = scmp.eq.s32.totalorder %s21, 1
      %p77 = por %p75, %p76
      %p78 = scmp.ne.s32.totalorder %s67, %s68
      %p79 = scmp.eq.s32.totalorder %s21, 0
      %p80 = por %p78, %p79
      %p81 = scmp.ne.s32.totalorder %s67, %s68
      %p82 = scmp.eq.s32.totalorder %s22, 1
      %p83 = por %p81, %p82
      %p85 = scmp.ne.s32.totalorder %s68, %s84
      %p86 = scmp.eq.s32.totalorder %s22, 0
      %p87 = por %p85, %p86
      %s88 = ssub.s32 %s24, %s31
      %p89 = scmp.eq.s32.totalorder %s88, 0
      %s91 = sadd.s32 %s90, 1
      %s92 = scalar_select %p89, %s90, %s91
      %p95 = pneg %p89
      %p96 = scmp.eq.s32.totalorder %s16, 1
      %p97 = por %p95, %p96
      %p98 = scmp.ne.s32.totalorder %s90, %s93
      %p99 = scmp.eq.s32.totalorder %s16, 0
      %p100 = por %p98, %p99
      %p101 = scmp.ne.s32.totalorder %s90, %s93
      %p102 = scmp.eq.s32.totalorder %s21, 1
      %p103 = por %p101, %p102
      %p104 = scmp.ne.s32.totalorder %s93, %s94
      %p105 = scmp.eq.s32.totalorder %s21, 0
      %p106 = por %p104, %p105
      %p107 = scmp.ne.s32.totalorder %s93, %s94
      %p108 = scmp.eq.s32.totalorder %s22, 1
      %p109 = por %p107, %p108
      %p111 = scmp.ne.s32.totalorder %s94, %s110
      %p112 = scmp.eq.s32.totalorder %s22, 0
      %p113 = por %p111, %p112
      %s114 = ssub.s32 %s23, %s35
      %s115 = ssub.s32 %s24, %s31
      %s116 = sor.u32 %s114, %s115
      %p117 = scmp.eq.s32.totalorder %s116, 0
      %s119 = sadd.s32 %s118, 1
      %s120 = scalar_select %p117, %s118, %s119
      %p123 = pneg %p117
      %p124 = scmp.eq.s32.totalorder %s16, 1
      %p125 = por %p123, %p124
      %p126 = scmp.ne.s32.totalorder %s118, %s121
      %p127 = scmp.eq.s32.totalorder %s16, 0
      %p128 = por %p126, %p127
      %p129 = scmp.ne.s32.totalorder %s118, %s121
      %p130 = scmp.eq.s32.totalorder %s21, 1
      %p131 = por %p129, %p130
      %p132 = scmp.ne.s32.totalorder %s121, %s122
      %p133 = scmp.eq.s32.totalorder %s21, 0
      %p134 = por %p132, %p133
      %p135 = scmp.ne.s32.totalorder %s121, %s122
      %p136 = scmp.eq.s32.totalorder %s22, 1
      %p137 = por %p135, %p136
      %p139 = scmp.ne.s32.totalorder %s122, %s138
      %p140 = scmp.eq.s32.totalorder %s22, 0
      %p141 = por %p139, %p140
      %p142 = scmp.le.s32.totalorder 1, %s16
      %p143 = scmp.lt.s32.totalorder %s16, 3
      %p144 = pnand %p142, %p143
      %p145 = pneg %p144
      // Predicated region
      $region9: #{tpu_custom_call.1} parent=5 // pred_check
        _
      $region10: #{tpu_custom_call.1} parent=5 // pred_check_branch
        %147 = sbr.rel (%p144) target = $region12
      $region11: #{tpu_custom_call.1} parent=5 // pred_region
        %s148 = ssub.s32 %s16, 1
        // Predicated region
        $region13: #{tpu_custom_call.1} parent=11 // pred_check
          %p149 = pneg %p80
        $region14: #{tpu_custom_call.1} parent=11 // pred_check_branch
          %151 = sbr.rel (%p149) target = $region16
        $region15: #{tpu_custom_call.1} parent=11 // pred_region
          %s153 = ssub.s32 512, 512
          %154 = vsyncadd [#allocation6], %s153
          %s155 = smul.addr %s26, 4
          %s156 = smul.addr %s155, 128
          %s157 = scalar_lea.hbm %s1, %s156
          %s158 = sshll.u32 [#allocation5], 4
          %s159 = int_to_ptr.vmem [resolvable:$true] %s158
          %164 = dma.hbm_to_vmem [thread:$0]  %s157, 512, %s159, [#allocation6], 128, 128, 8
        $region16: #{tpu_custom_call.1} parent=11 // pred_fallthru
          _
        // Predicated region
        $region17: #{tpu_custom_call.1} parent=11 // pred_check
          %p165 = pneg %p106
        $region18: #{tpu_custom_call.1} parent=11 // pred_check_branch
          %167 = sbr.rel (%p165) target = $region20
        $region19: #{tpu_custom_call.1} parent=11 // pred_region
          %p168 = scmp.lt.s32.totalorder %s26, 0
          %s169 = scalar_select %p168, %s26, 0
          %s170 = scalar_lea.vmem %s2, %s169
        $region20: #{tpu_custom_call.1} parent=11 // pred_fallthru
          _
      $region12: #{tpu_custom_call.1} parent=5 // pred_fallthru
        _
      %p171 = scmp.lt.s32.totalorder %s16, 2
      // Predicated region
      $region21: #{tpu_custom_call.1} parent=5 // pred_check
        %p172 = pneg %p171
      $region22: #{tpu_custom_call.1} parent=5 // pred_check_branch
        %174 = sbr.rel (%p172) target = $region24
      $region23: #{tpu_custom_call.1} parent=5 // pred_region
        // Predicated region
        $region25: #{tpu_custom_call.1} parent=23 // pred_check
          %p175 = pneg %p48
        $region26: #{tpu_custom_call.1} parent=23 // pred_check_branch
          %177 = sbr.rel (%p175) target = $region28
        $region27: #{tpu_custom_call.1} parent=23 // pred_region
          %s178 = sand.u32 %s38, 1
          %s179 = scalar_lea.sflag [#allocation3], %s178
          %s180 = sand.u32 %s38, 1
          %s181 = smul.addr %s180, 8
          %s182 = scalar_lea.vmem [#allocation2], %s181
          %s184 = ssub.s32 128, 128
          %185 = vsyncadd %s179, %s184
          %s186 = smul.addr %s23, 128
          %s187 = scalar_lea.hbm %s0, %s186
          %s189 = sshll.u32 %s182, 4
          %s190 = int_to_ptr.vmem [resolvable:$true] %s189
          %192 = dma.hbm_to_vmem [thread:$0]  %s187, 128, %s190, %s179
        $region28: #{tpu_custom_call.1} parent=23 // pred_fallthru
          _
      $region24: #{tpu_custom_call.1} parent=5 // pred_fallthru
        _
      %p193 = scmp.le.s32.totalorder 1, %s16
      %p194 = scmp.lt.s32.totalorder %s16, 3
      %p195 = pnand %p193, %p194
      %p196 = pneg %p195
      // Predicated region
      $region29: #{tpu_custom_call.1} parent=5 // pred_check
        _
      $region30: #{tpu_custom_call.1} parent=5 // pred_check_branch
        %198 = sbr.rel (%p195) target = $region32
      $region31: #{tpu_custom_call.1} parent=5 // pred_region
        %s199 = ssub.s32 %s16, 1
        %s200 = sand.u32 %s41, 1
        %s201 = scalar_lea.sflag [#allocation3], %s200
        %s202 = sand.u32 %s41, 1
        %s203 = smul.addr %s202, 8
        %s204 = scalar_lea.vmem [#allocation2], %s203
        // Predicated region
        $region33: #{tpu_custom_call.1} parent=31 // pred_check
          %p205 = pneg %p54
        $region34: #{tpu_custom_call.1} parent=31 // pred_check_branch
          %207 = sbr.rel (%p205) target = $region36
        $region35: #{tpu_custom_call.1} parent=31 // pred_region
          %208 = dma.done %s201, 128
        $region36: #{tpu_custom_call.1} parent=31 // pred_fallthru
          _
        // Predicated region
        $region37: #{tpu_custom_call.1} parent=31 // pred_check
          %p209 = pneg %p80
        $region38: #{tpu_custom_call.1} parent=31 // pred_check_branch
          %211 = sbr.rel (%p209) target = $region40
        $region39: #{tpu_custom_call.1} parent=31 // pred_region
          %212 = dma.done [#allocation6], 512
        $region40: #{tpu_custom_call.1} parent=31 // pred_fallthru
          _
        %s213 = sand.u32 %s41, 1
        %s214 = scalar_lea.sflag [#allocation3], %s213
        %s215 = sand.u32 %s41, 1
        %s216 = smul.addr %s215, 8
        %s217 = scalar_lea.vmem [#allocation2], %s216
        %p218 = pneg %p54
        %p219 = pneg %p51
        %p220 = pneg %p80
        %p221 = pneg %p77
        %p222 = scmp.lt.s32.totalorder %s26, 0
        %s223 = scalar_select %p222, %s26, 0
        %s224 = scalar_lea.vmem %s2, %s223
        %p225 = pneg %p106
        %p226 = pneg %p103
        %p227 = pneg %p134
        %p228 = pneg %p131
        %s229 = sand.u32 %s121, 1
        %s230 = scalar_lea.sflag [#allocation4], %s229
        %s231 = sand.u32 %s121, 1
        %s232 = smul.addr %s231, 8
        %s233 = scalar_lea.vmem [#allocation7], %s232
        %p234 = scmp.lt.s32.totalorder %s26, 0
        %s235 = scalar_select %p234, %s26, 0
        %s236 = scalar_lea.vmem %s2, %s235
        %v237 = vld [vmem:[%s204] sm:$0xff]
        %v238 = vld [vmem:[#allocation5] sm:$0xff]
        %v239 = vld [vmem:[#allocation5 + $0x8] sm:$0xff]
        %v240 = vld [vmem:[#allocation5 + $0x10] sm:$0xff]
        %v241 = vld [vmem:[#allocation5 + $0x18] sm:$0xff]
        %v242 = vld [vmem:[%s236] sm:$0x1]
        %v244 = vlaneseq
        %v245 = vshrl.u32 %v244, 7
        %v246 = vsub.s32 0, %v245
        %v247 = vrot.slane %v242, %v246
        %vm249 = vcmask 261120
        %v251 = vsel %vm249, %v237, 0
        %253 = vmatprep.subr.mxu0 0.0
        %254 = vmatpush1.msra.mxu0 0.0
        %255 = vmatprep.subr.mxu0 0.0
        %256 = vmatpush1.msra.mxu0 0.0
        %257 = vmatprep.subr.mxu0 0.0
        %258 = vmatpush1.msra.mxu0 0.0
        %259 = vmatprep.subr.mxu0 0.0
        %260 = vmatpush1.msra.mxu0 0.0
        %261 = vmatprep.subr.mxu0 0.0
        %262 = vmatpush1.msra.mxu0 0.0
        %263 = vmatprep.subr.mxu0 0.0
        %264 = vmatpush1.msra.mxu0 0.0
        %265 = vmatprep.subr.mxu0 0.0
        %266 = vmatpush1.msra.mxu0 0.0
        %267 = vmatprep.subr.mxu0 0.0
        %268 = vmatpush1.msra.mxu0 0.0
        %269 = vmatprep.subr.mxu0 0.0
        %270 = vmatpush1.msra.mxu0 0.0
        %271 = vmatprep.subr.mxu0 0.0
        %272 = vmatpush1.msra.mxu0 0.0
        %273 = vmatprep.subr.mxu0 0.0
        %274 = vmatpush1.msra.mxu0 0.0
        %275 = vmatprep.subr.mxu0 0.0
        %276 = vmatpush1.msra.mxu0 0.0
        %277 = vmatprep.subr.mxu0 0.0
        %278 = vmatpush1.msra.mxu0 %v241
        %279 = vmatprep.subr.mxu0 0.0
        %280 = vmatpush1.msra.mxu0 %v240
        %281 = vmatprep.subr.mxu0 0.0
        %282 = vmatpush1.msra.mxu0 %v239
        %283 = vmatprep.subr.mxu0 0.0
        %284 = vmatpush1.msra.mxu0 %v238
        %285 = vmatprep.subr.mxu0 0.0
        %286 = vmatpush2.msra.mxu0 0.0
        %287 = vmatprep.subr.mxu0 0.0
        %288 = vmatpush2.msra.mxu0 0.0
        %289 = vmatprep.subr.mxu0 0.0
        %290 = vmatpush2.msra.mxu0 0.0
        %291 = vmatprep.subr.mxu0 0.0
        %292 = vmatpush2.msra.mxu0 0.0
        %293 = vmatprep.subr.mxu0 0.0
        %294 = vmatpush2.msra.mxu0 0.0
        %295 = vmatprep.subr.mxu0 0.0
        %296 = vmatpush2.msra.mxu0 0.0
        %297 = vmatprep.subr.mxu0 0.0
        %298 = vmatpush2.msra.mxu0 0.0
        %299 = vmatprep.subr.mxu0 0.0
        %300 = vmatpush2.msra.mxu0 0.0
        %301 = vmatprep.subr.mxu0 0.0
        %302 = vmatpush2.msra.mxu0 0.0
        %303 = vmatprep.subr.mxu0 0.0
        %304 = vmatpush2.msra.mxu0 0.0
        %305 = vmatprep.subr.mxu0 0.0
        %306 = vmatpush2.msra.mxu0 0.0
        %307 = vmatprep.subr.mxu0 0.0
        %308 = vmatpush2.msra.mxu0 0.0
        %309 = vmatprep.subr.mxu0 0.0
        %310 = vmatpush2.msra.mxu0 0.0
        %311 = vmatprep.subr.mxu0 0.0
        %312 = vmatpush2.msra.mxu0 0.0
        %313 = vmatprep.subr.mxu0 0.0
        %314 = vmatpush2.msra.mxu0 0.0
        %315 = vmatprep.subr.mxu0 0.0
        %316 = vmatpush2.msra.mxu0 0.0
        %317 = vmatprep.mubr.f32.mxu0 0.0
        %318 = vmatmul.mubr.f32.gmra.mxu0 %v251
        %v319 = vpop.f32.mrf.mxu0
        %v320 = vadd.f32 %v247, %v319
        %v321 = vpop.f32.mrf.mxu0
        %322 = vdwg.mxu0
        %v323 = vmul.f32 %v320, 0.25
        %325 = vrot.lane.b32.xlu0 %v320, 96
        %v326 = vpop.permute.xlu0 %325
        %vm327 = vcmask 130048
        %v329 = vsel %vm327, %v323, 0
        %v331 = vsel %vm327, %v326, 0
        %333 = vmatprep.subr.mxu0 0.0
        %334 = vmatpush1.xpose.msra.mxu0 0.0
        %335 = vmatprep.subr.mxu0 0.0
        %336 = vmatpush1.xpose.msra.mxu0 0.0
        %337 = vmatprep.subr.mxu0 0.0
        %338 = vmatpush1.xpose.msra.mxu0 0.0
        %339 = vmatprep.subr.mxu0 0.0
        %340 = vmatpush1.xpose.msra.mxu0 0.0
        %341 = vmatprep.subr.mxu0 0.0
        %342 = vmatpush1.xpose.msra.mxu0 0.0
        %343 = vmatprep.subr.mxu0 0.0
        %344 = vmatpush1.xpose.msra.mxu0 0.0
        %345 = vmatprep.subr.mxu0 0.0
        %346 = vmatpush1.xpose.msra.mxu0 0.0
        %347 = vmatprep.subr.mxu0 0.0
        %348 = vmatpush1.xpose.msra.mxu0 0.0
        %349 = vmatprep.subr.mxu0 0.0
        %350 = vmatpush1.xpose.msra.mxu0 0.0
        %351 = vmatprep.subr.mxu0 0.0
        %352 = vmatpush1.xpose.msra.mxu0 0.0
        %353 = vmatprep.subr.mxu0 0.0
        %354 = vmatpush1.xpose.msra.mxu0 0.0
        %355 = vmatprep.subr.mxu0 0.0
        %356 = vmatpush1.xpose.msra.mxu0 0.0
        %357 = vmatprep.subr.mxu0 0.0
        %358 = vmatpush1.xpose.msra.mxu0 0.0
        %359 = vmatprep.subr.mxu0 0.0
        %360 = vmatpush1.xpose.msra.mxu0 0.0
        %361 = vmatprep.subr.mxu0 0.0
        %362 = vmatpush1.xpose.msra.mxu0 0.0
        %363 = vmatprep.subr.mxu0 0.0
        %364 = vmatpush1.xpose.msra.mxu0 %v331
        %365 = vmatprep.subr.mxu0 0.0
        %366 = vmatpush2.xpose.msra.mxu0 0.0
        %367 = vmatprep.subr.mxu0 0.0
        %368 = vmatpush2.xpose.msra.mxu0 0.0
        %369 = vmatprep.subr.mxu0 0.0
        %370 = vmatpush2.xpose.msra.mxu0 0.0
        %371 = vmatprep.subr.mxu0 0.0
        %372 = vmatpush2.xpose.msra.mxu0 0.0
        %373 = vmatprep.subr.mxu0 0.0
        %374 = vmatpush2.xpose.msra.mxu0 0.0
        %375 = vmatprep.subr.mxu0 0.0
        %376 = vmatpush2.xpose.msra.mxu0 0.0
        %377 = vmatprep.subr.mxu0 0.0
        %378 = vmatpush2.xpose.msra.mxu0 0.0
        %379 = vmatprep.subr.mxu0 0.0
        %380 = vmatpush2.xpose.msra.mxu0 0.0
        %381 = vmatprep.subr.mxu0 0.0
        %382 = vmatpush2.xpose.msra.mxu0 0.0
        %383 = vmatprep.subr.mxu0 0.0
        %384 = vmatpush2.xpose.msra.mxu0 0.0
        %385 = vmatprep.subr.mxu0 0.0
        %386 = vmatpush2.xpose.msra.mxu0 0.0
        %387 = vmatprep.subr.mxu0 0.0
        %388 = vmatpush2.xpose.msra.mxu0 0.0
        %389 = vmatprep.subr.mxu0 0.0
        %390 = vmatpush2.xpose.msra.mxu0 0.0
        %391 = vmatprep.subr.mxu0 0.0
        %392 = vmatpush2.xpose.msra.mxu0 0.0
        %393 = vmatprep.subr.mxu0 0.0
        %394 = vmatpush2.xpose.msra.mxu0 0.0
        %395 = vmatprep.subr.mxu0 0.0
        %396 = vmatpush2.xpose.msra.mxu0 0.0
        %397 = vmatprep.mubr.f32.mxu0 0.0
        %398 = vmatmul.mubr.f32.gmra.mxu0 %v329
        %v399 = vpop.f32.mrf.mxu0
        %v400 = vadd.f32 0.0, %v399
        %v401 = vpop.f32.mrf.mxu0
        %402 = vdwg.mxu0
        %vm403 = vcmask 64512
        %v404 = vsel %vm403, %v400, -inf
        %405 = vmax.xlane.f32.xlu0 %v404
        %v406 = vpop.xlane.xlu0 %405
        %v407 = vsub.f32 %v400, %v406
        %v408 = vmul.f32 %v407, 1.442695
        %v409 = vpow.pop %v408
        %v410 = vsel %vm403, %v409, 0.0
        %411 = vadd.xlane.f32.xlu0 %v410
        %v412 = vpop.xlane.xlu0 %411
        %v413 = vrcp.pop %v412
        %v414 = vmul.f32 %v409, %v413
        %415 = vrot.lane.b32.xlu0 %v320, 64
        %v416 = vpop.permute.xlu0 %415
        %v419 = vsel %vm403, %v414, 0
        %421 = vmatprep.subr.mxu0 0.0
        %422 = vmatpush1.msra.mxu0 0.0
        %423 = vmatprep.subr.mxu0 0.0
        %424 = vmatpush1.msra.mxu0 0.0
        %425 = vmatprep.subr.mxu0 0.0
        %426 = vmatpush1.msra.mxu0 0.0
        %427 = vmatprep.subr.mxu0 0.0
        %428 = vmatpush1.msra.mxu0 0.0
        %429 = vmatprep.subr.mxu0 0.0
        %430 = vmatpush1.msra.mxu0 0.0
        %431 = vmatprep.subr.mxu0 0.0
        %432 = vmatpush1.msra.mxu0 0.0
        %433 = vmatprep.subr.mxu0 0.0
        %434 = vmatpush1.msra.mxu0 0.0
        %435 = vmatprep.subr.mxu0 0.0
        %436 = vmatpush1.msra.mxu0 0.0
        %437 = vmatprep.subr.mxu0 0.0
        %438 = vmatpush1.msra.mxu0 0.0
        %439 = vmatprep.subr.mxu0 0.0
        %440 = vmatpush1.msra.mxu0 0.0
        %441 = vmatprep.subr.mxu0 0.0
        %442 = vmatpush1.msra.mxu0 0.0
        %443 = vmatprep.subr.mxu0 0.0
        %444 = vmatpush1.msra.mxu0 0.0
        %445 = vmatprep.subr.mxu0 0.0
        %446 = vmatpush1.msra.mxu0 0.0
        %447 = vmatprep.subr.mxu0 0.0
        %448 = vmatpush1.msra.mxu0 0.0
        %449 = vmatprep.subr.mxu0 0.0
        %450 = vmatpush1.msra.mxu0 0.0
        %451 = vmatprep.subr.mxu0 0.0
        %452 = vmatpush1.msra.mxu0 %v416
        %453 = vmatprep.subr.mxu0 0.0
        %454 = vmatpush2.msra.mxu0 0.0
        %455 = vmatprep.subr.mxu0 0.0
        %456 = vmatpush2.msra.mxu0 0.0
        %457 = vmatprep.subr.mxu0 0.0
        %458 = vmatpush2.msra.mxu0 0.0
        %459 = vmatprep.subr.mxu0 0.0
        %460 = vmatpush2.msra.mxu0 0.0
        %461 = vmatprep.subr.mxu0 0.0
        %462 = vmatpush2.msra.mxu0 0.0
        %463 = vmatprep.subr.mxu0 0.0
        %464 = vmatpush2.msra.mxu0 0.0
        %465 = vmatprep.subr.mxu0 0.0
        %466 = vmatpush2.msra.mxu0 0.0
        %467 = vmatprep.subr.mxu0 0.0
        %468 = vmatpush2.msra.mxu0 0.0
        %469 = vmatprep.subr.mxu0 0.0
        %470 = vmatpush2.msra.mxu0 0.0
        %471 = vmatprep.subr.mxu0 0.0
        %472 = vmatpush2.msra.mxu0 0.0
        %473 = vmatprep.subr.mxu0 0.0
        %474 = vmatpush2.msra.mxu0 0.0
        %475 = vmatprep.subr.mxu0 0.0
        %476 = vmatpush2.msra.mxu0 0.0
        %477 = vmatprep.subr.mxu0 0.0
        %478 = vmatpush2.msra.mxu0 0.0
        %479 = vmatprep.subr.mxu0 0.0
        %480 = vmatpush2.msra.mxu0 0.0
        %481 = vmatprep.subr.mxu0 0.0
        %482 = vmatpush2.msra.mxu0 0.0
        %483 = vmatprep.subr.mxu0 0.0
        %484 = vmatpush2.msra.mxu0 0.0
        %485 = vmatprep.mubr.f32.mxu0 0.0
        %486 = vmatmul.mubr.f32.gmra.mxu0 %v419
        %v487 = vpop.f32.mrf.mxu0
        %v488 = vadd.f32 0.0, %v487
        %v489 = vpop.f32.mrf.mxu0
        %490 = vdwg.mxu0
        %491 = vrot.lane.b32.xlu0 %v323, 112
        %v492 = vpop.permute.xlu0 %491
        %493 = vrot.lane.b32.xlu0 %v320, 80
        %v494 = vpop.permute.xlu0 %493
        %v495 = vsel %vm327, %v492, 0
        %v497 = vsel %vm327, %v494, 0
        %499 = vmatprep.subr.mxu0 0.0
        %500 = vmatpush1.xpose.msra.mxu0 0.0
        %501 = vmatprep.subr.mxu0 0.0
        %502 = vmatpush1.xpose.msra.mxu0 0.0
        %503 = vmatprep.subr.mxu0 0.0
        %504 = vmatpush1.xpose.msra.mxu0 0.0
        %505 = vmatprep.subr.mxu0 0.0
        %506 = vmatpush1.xpose.msra.mxu0 0.0
        %507 = vmatprep.subr.mxu0 0.0
        %508 = vmatpush1.xpose.msra.mxu0 0.0
        %509 = vmatprep.subr.mxu0 0.0
        %510 = vmatpush1.xpose.msra.mxu0 0.0
        %511 = vmatprep.subr.mxu0 0.0
        %512 = vmatpush1.xpose.msra.mxu0 0.0
        %513 = vmatprep.subr.mxu0 0.0
        %514 = vmatpush1.xpose.msra.mxu0 0.0
        %515 = vmatprep.subr.mxu0 0.0
        %516 = vmatpush1.xpose.msra.mxu0 0.0
        %517 = vmatprep.subr.mxu0 0.0
        %518 = vmatpush1.xpose.msra.mxu0 0.0
        %519 = vmatprep.subr.mxu0 0.0
        %520 = vmatpush1.xpose.msra.mxu0 0.0
        %521 = vmatprep.subr.mxu0 0.0
        %522 = vmatpush1.xpose.msra.mxu0 0.0
        %523 = vmatprep.subr.mxu0 0.0
        %524 = vmatpush1.xpose.msra.mxu0 0.0
        %525 = vmatprep.subr.mxu0 0.0
        %526 = vmatpush1.xpose.msra.mxu0 0.0
        %527 = vmatprep.subr.mxu0 0.0
        %528 = vmatpush1.xpose.msra.mxu0 0.0
        %529 = vmatprep.subr.mxu0 0.0
        %530 = vmatpush1.xpose.msra.mxu0 %v497
        %531 = vmatprep.subr.mxu0 0.0
        %532 = vmatpush2.xpose.msra.mxu0 0.0
        %533 = vmatprep.subr.mxu0 0.0
        %534 = vmatpush2.xpose.msra.mxu0 0.0
        %535 = vmatprep.subr.mxu0 0.0
        %536 = vmatpush2.xpose.msra.mxu0 0.0
        %537 = vmatprep.subr.mxu0 0.0
        %538 = vmatpush2.xpose.msra.mxu0 0.0
        %539 = vmatprep.subr.mxu0 0.0
        %540 = vmatpush2.xpose.msra.mxu0 0.0
        %541 = vmatprep.subr.mxu0 0.0
        %542 = vmatpush2.xpose.msra.mxu0 0.0
        %543 = vmatprep.subr.mxu0 0.0
        %544 = vmatpush2.xpose.msra.mxu0 0.0
        %545 = vmatprep.subr.mxu0 0.0
        %546 = vmatpush2.xpose.msra.mxu0 0.0
        %547 = vmatprep.subr.mxu0 0.0
        %548 = vmatpush2.xpose.msra.mxu0 0.0
        %549 = vmatprep.subr.mxu0 0.0
        %550 = vmatpush2.xpose.msra.mxu0 0.0
        %551 = vmatprep.subr.mxu0 0.0
        %552 = vmatpush2.xpose.msra.mxu0 0.0
        %553 = vmatprep.subr.mxu0 0.0
        %554 = vmatpush2.xpose.msra.mxu0 0.0
        %555 = vmatprep.subr.mxu0 0.0
        %556 = vmatpush2.xpose.msra.mxu0 0.0
        %557 = vmatprep.subr.mxu0 0.0
        %558 = vmatpush2.xpose.msra.mxu0 0.0
        %559 = vmatprep.subr.mxu0 0.0
        %560 = vmatpush2.xpose.msra.mxu0 0.0
        %561 = vmatprep.subr.mxu0 0.0
        %562 = vmatpush2.xpose.msra.mxu0 0.0
        %563 = vmatprep.mubr.f32.mxu0 0.0
        %564 = vmatmul.mubr.f32.gmra.mxu0 %v495
        %v565 = vpop.f32.mrf.mxu0
        %v566 = vadd.f32 0.0, %v565
        %v567 = vpop.f32.mrf.mxu0
        %568 = vdwg.mxu0
        %v569 = vsel %vm403, %v566, -inf
        %570 = vmax.xlane.f32.xlu0 %v569
        %v571 = vpop.xlane.xlu0 %570
        %v572 = vsub.f32 %v566, %v571
        %v573 = vmul.f32 %v572, 1.442695
        %v574 = vpow.pop %v573
        %v575 = vsel %vm403, %v574, 0.0
        %576 = vadd.xlane.f32.xlu0 %v575
        %v577 = vpop.xlane.xlu0 %576
        %v578 = vrcp.pop %v577
        %v579 = vmul.f32 %v574, %v578
        %580 = vrot.lane.b32.xlu0 %v320, 48
        %v581 = vpop.permute.xlu0 %580
        %v584 = vsel %vm403, %v579, 0
        %586 = vmatprep.subr.mxu0 0.0
        %587 = vmatpush1.msra.mxu0 0.0
        %588 = vmatprep.subr.mxu0 0.0
        %589 = vmatpush1.msra.mxu0 0.0
        %590 = vmatprep.subr.mxu0 0.0
        %591 = vmatpush1.msra.mxu0 0.0
        %592 = vmatprep.subr.mxu0 0.0
        %593 = vmatpush1.msra.mxu0 0.0
        %594 = vmatprep.subr.mxu0 0.0
        %595 = vmatpush1.msra.mxu0 0.0
        %596 = vmatprep.subr.mxu0 0.0
        %597 = vmatpush1.msra.mxu0 0.0
        %598 = vmatprep.subr.mxu0 0.0
        %599 = vmatpush1.msra.mxu0 0.0
        %600 = vmatprep.subr.mxu0 0.0
        %601 = vmatpush1.msra.mxu0 0.0
        %602 = vmatprep.subr.mxu0 0.0
        %603 = vmatpush1.msra.mxu0 0.0
        %604 = vmatprep.subr.mxu0 0.0
        %605 = vmatpush1.msra.mxu0 0.0
        %606 = vmatprep.subr.mxu0 0.0
        %607 = vmatpush1.msra.mxu0 0.0
        %608 = vmatprep.subr.mxu0 0.0
        %609 = vmatpush1.msra.mxu0 0.0
        %610 = vmatprep.subr.mxu0 0.0
        %611 = vmatpush1.msra.mxu0 0.0
        %612 = vmatprep.subr.mxu0 0.0
        %613 = vmatpush1.msra.mxu0 0.0
        %614 = vmatprep.subr.mxu0 0.0
        %615 = vmatpush1.msra.mxu0 0.0
        %616 = vmatprep.subr.mxu0 0.0
        %617 = vmatpush1.msra.mxu0 %v581
        %618 = vmatprep.subr.mxu0 0.0
        %619 = vmatpush2.msra.mxu0 0.0
        %620 = vmatprep.subr.mxu0 0.0
        %621 = vmatpush2.msra.mxu0 0.0
        %622 = vmatprep.subr.mxu0 0.0
        %623 = vmatpush2.msra.mxu0 0.0
        %624 = vmatprep.subr.mxu0 0.0
        %625 = vmatpush2.msra.mxu0 0.0
        %626 = vmatprep.subr.mxu0 0.0
        %627 = vmatpush2.msra.mxu0 0.0
        %628 = vmatprep.subr.mxu0 0.0
        %629 = vmatpush2.msra.mxu0 0.0
        %630 = vmatprep.subr.mxu0 0.0
        %631 = vmatpush2.msra.mxu0 0.0
        %632 = vmatprep.subr.mxu0 0.0
        %633 = vmatpush2.msra.mxu0 0.0
        %634 = vmatprep.subr.mxu0 0.0
        %635 = vmatpush2.msra.mxu0 0.0
        %636 = vmatprep.subr.mxu0 0.0
        %637 = vmatpush2.msra.mxu0 0.0
        %638 = vmatprep.subr.mxu0 0.0
        %639 = vmatpush2.msra.mxu0 0.0
        %640 = vmatprep.subr.mxu0 0.0
        %641 = vmatpush2.msra.mxu0 0.0
        %642 = vmatprep.subr.mxu0 0.0
        %643 = vmatpush2.msra.mxu0 0.0
        %644 = vmatprep.subr.mxu0 0.0
        %645 = vmatpush2.msra.mxu0 0.0
        %646 = vmatprep.subr.mxu0 0.0
        %647 = vmatpush2.msra.mxu0 0.0
        %648 = vmatprep.subr.mxu0 0.0
        %649 = vmatpush2.msra.mxu0 0.0
        %650 = vmatprep.mubr.f32.mxu0 0.0
        %651 = vmatmul.mubr.f32.gmra.mxu0 %v584
        %v652 = vpop.f32.mrf.mxu0
        %v653 = vadd.f32 0.0, %v652
        %v654 = vpop.f32.mrf.mxu0
        %655 = vdwg.mxu0
        %657 = vrot.lane.b32.xlu0 %v653, 16
        %v658 = vpop.permute.xlu0 %657
        %v660 = vsel %vm327, %v488, %v658
        %661 = vst.msk [vmem:[%s233] sm:$0xff] %vm249, %v660
        %s662 = sand.u32 %s121, 1
        %s663 = scalar_lea.sflag [#allocation4], %s662
        %s664 = sand.u32 %s121, 1
        %s665 = smul.addr %s664, 8
        %s666 = scalar_lea.vmem [#allocation7], %s665
        // Predicated region
        $region41: #{tpu_custom_call.1} parent=31 // pred_check
          %p667 = pneg %p131
        $region42: #{tpu_custom_call.1} parent=31 // pred_check_branch
          %669 = sbr.rel (%p667) target = $region44
        $region43: #{tpu_custom_call.1} parent=31 // pred_region
          %s671 = ssub.s32 128, 128
          %672 = vsyncadd %s663, %s671
          %s673 = sadd.s32 %s26, %s25
          %s674 = smul.addr %s673, 128
          %s675 = scalar_lea.hbm %s3, %s674
          %s677 = sshll.u32 %s666, 4
          %s678 = int_to_ptr.vmem [resolvable:$true] %s677
          %680 = dma.vmem_to_hbm [thread:$0]  %s678, 128, %s675, %s663
        $region44: #{tpu_custom_call.1} parent=31 // pred_fallthru
          _
      $region32: #{tpu_custom_call.1} parent=5 // pred_fallthru
        _
      %p681 = scmp.le.s32.totalorder 2, %s16
      // Predicated region
      $region45: #{tpu_custom_call.1} parent=5 // pred_check
        %p682 = pneg %p681
      $region46: #{tpu_custom_call.1} parent=5 // pred_check_branch
        %684 = sbr.rel (%p682) target = $region48
      $region47: #{tpu_custom_call.1} parent=5 // pred_region
        %s685 = ssub.s32 %s16, 2
        // Predicated region
        $region49: #{tpu_custom_call.1} parent=47 // pred_check
          %p686 = pneg %p137
        $region50: #{tpu_custom_call.1} parent=47 // pred_check_branch
          %688 = sbr.rel (%p686) target = $region52
        $region51: #{tpu_custom_call.1} parent=47 // pred_region
          %s689 = sand.u32 %s122, 1
          %s690 = scalar_lea.sflag [#allocation4], %s689
          %s691 = sand.u32 %s122, 1
          %s692 = smul.addr %s691, 8
          %s693 = scalar_lea.vmem [#allocation7], %s692
          %694 = dma.done %s690, 128
        $region52: #{tpu_custom_call.1} parent=47 // pred_fallthru
          _
      $region48: #{tpu_custom_call.1} parent=5 // pred_fallthru
        _
    $region6: #{tpu_custom_call.1} parent=1 // loop_footer
      %s20 = sadd.s32 1, %s16
    $region7: #{tpu_custom_call.1} parent=1 // loop_footer_branch
      %15 = sbr.rel target = $region3
    $region8: #{tpu_custom_call.1} parent=1 // loop_exit
      _
    %695 = vsyncpa [#allocation3], 1
    %s696 = scalar_lea.sflag [#allocation3], 1
    %697 = vsyncpa %s696, 1
    %698 = vsyncpa [#allocation6], 1
    %699 = vsyncpa [#allocation4], 1
    %s700 = scalar_lea.sflag [#allocation4], 1
    %701 = vsyncpa %s700, 1

</llo_original>
